<compile_context>
chip_gen: v7x
topology: tpu7x:2x2x1
jax: 0.10.0
libtpu: 0.0.40
codegen_flags: <defaults>
</compile_context>

<pallas_src>
import jax
import jax.numpy as jnp
from jax.experimental import pallas as pl
from jax.experimental.pallas import tpu as pltpu

CIN = 9      # channels of x1 (full input, DMA'd whole)
CIN2 = 7     # conv2 weight input channels (first 7 channels of x1 are used)
COUT2 = 14   # conv2 output channels


def conv1x1_relu_kernel(x_ref, w_ref, o_ref):
    # x_ref : (B, CIN,  HW_BLK)  full-channel block; [:CIN2] slice done here
    # w_ref : (COUT2, CIN2)      1x1 conv weights (== PyTorch OIHW[:, :, 0, 0])
    # o_ref : (B, COUT2, HW_BLK) lane-dense output (last dim multiple of 128)
    w = w_ref[...]
    B = x_ref.shape[0]  # static (block shape) -> unrolled loop, no transpose
    for b in range(B):
        v4 = jnp.dot(w, x_ref[b, :CIN2, :],
                     preferred_element_type=jnp.float32)   # (COUT2, HW_BLK)
        o_ref[b] = jnp.maximum(v4 - 16.0, 0.0)              # v5 = v4 - 16; v6 = relu


def _largest_divisor_at_most(n, cap):
    for b in range(min(n, cap), 0, -1):
        if n % b == 0:
            return b
    return 1


def model_forward(x_nchw, w2_oihw):
    """x_nchw: (N, 9, H, W) f32; w2_oihw: (14, 7, 1, 1) f32. Returns v6 NCHW."""
    N, C, H, W = x_nchw.shape
    HW = H * W

    # Pure metadata reshape / tiny weight squeeze -- no channel slice/copy of x.
    x = x_nchw.reshape(N, C, HW)
    w2 = w2_oihw[:, :, 0, 0]                       # (COUT2, CIN2)

    # Batch elements per grid step (amortize per-step overhead, bounded VMEM).
    B = _largest_divisor_at_most(N, 32)
    # Split HW into two lane-dense halves (second TC on v7x) when divisible.
    HW_BLK = HW // 2 if (HW % 256 == 0 and HW >= 256) else HW

    grid = (N // B, HW // HW_BLK)

    in_bytes = x.size * x.dtype.itemsize + w2.size * w2.dtype.itemsize
    out_bytes = N * COUT2 * HW * 4
    cost = pl.CostEstimate(flops=2 * N * COUT2 * CIN2 * HW,
                           transcendentals=0,
                           bytes_accessed=in_bytes + out_bytes)

    v6 = pl.pallas_call(
        conv1x1_relu_kernel,
        out_shape=jax.ShapeDtypeStruct((N, COUT2, HW), jnp.float32),
        grid_spec=pltpu.PrefetchScalarGridSpec(
            num_scalar_prefetch=0,
            grid=grid,
            in_specs=[
                # Full channel dim (9) in the block => legal per (8,128) rule.
                pl.BlockSpec((B, C, HW_BLK), lambda n, h: (n, 0, h)),
                pl.BlockSpec((COUT2, CIN2), lambda n, h: (0, 0)),
            ],
            out_specs=pl.BlockSpec((B, COUT2, HW_BLK), lambda n, h: (n, 0, h)),
        ),
        compiler_params=pltpu.CompilerParams(
            dimension_semantics=("parallel", "parallel")),
        cost_estimate=cost,
    )(x, w2)

    return v6.reshape(N, COUT2, H, W)


if __name__ == "__main__":
    key = jax.random.PRNGKey(0)
    k_x, k_w2 = jax.random.split(key, 2)

    # Module spec uses (1, 9, 32, 32); use batch=2 to also exercise batch
    # blocking while keeping shapes small and consistent with the forward.
    N, C, H, W = 2, CIN, 32, 32

    # Scale inputs so relu(conv2(x) - 16) is not identically zero (real signal).
    x = 3.0 * jax.random.normal(k_x, (N, C, H, W), dtype=jnp.float32)
    w2 = jax.random.normal(k_w2, (COUT2, CIN2, 1, 1), dtype=jnp.float32)

    v6 = model_forward(x, w2)
    jax.block_until_ready(v6)

    # Reference check against the XLA convolution.
    ref_v4 = jax.lax.conv_general_dilated(
        x[:, :CIN2], w2, window_strides=(1, 1), padding="VALID",
        dimension_numbers=("NCHW", "OIHW", "NCHW"))
    ref_v6 = jnp.maximum(ref_v4 - 16.0, 0.0)

    assert v6.shape == (N, COUT2, H, W)
    assert bool((v6 > 0).any()), "test has no signal (all outputs zero)"
    assert jnp.allclose(v6, ref_v6, atol=1e-4, rtol=1e-4)
    print("KERNEL_OK")
</pallas_src>

<mosaic_0001>
module attributes {stable_mosaic.version = 11 : i64} {
  func.func @conv1x1_relu_kernel(%arg0: i32, %arg1: i32, %arg2: memref<2x9x512xf32, #tpu.memory_space<vmem>>, %arg3: memref<14x7xf32, #tpu.memory_space<vmem>>, %arg4: memref<2x14x512xf32, #tpu.memory_space<vmem>>) attributes {dimension_semantics = [#tpu.dimension_semantics<parallel>, #tpu.dimension_semantics<parallel>], iteration_bounds = array<i64: 1, 2>, scalar_prefetch = 0 : i64, scratch_operands = 0 : i64, tpu.core_type = #tpu.core_type<tc>, window_params = [{transform_indices = @transform_0, window_bounds = array<i64: 2, 9, 512>}, {pipeline_mode = #tpu.pipeline_mode<synchronous>, transform_indices = @transform_1, window_bounds = array<i64: 14, 7>}, {transform_indices = @transform_2, window_bounds = array<i64: 2, 14, 512>}]} {
    %c0 = arith.constant 0 : index
    %c0_0 = arith.constant 0 : index
    %0 = vector.load %arg3[%c0, %c0_0] : memref<14x7xf32, #tpu.memory_space<vmem>>, vector<14x7xf32>
    %c0_1 = arith.constant 0 : index
    %c0_2 = arith.constant 0 : index
    %c0_3 = arith.constant 0 : index
    %1 = vector.load %arg2[%c0_1, %c0_2, %c0_3] : memref<2x9x512xf32, #tpu.memory_space<vmem>>, vector<1x7x512xf32>
    %2 = vector.shape_cast %1 : vector<1x7x512xf32> to vector<7x512xf32>
    %cst = arith.constant dense<0.000000e+00> : vector<14x512xf32>
    %3 = tpu.matmul %0, %2, %cst {dimension_numbers = #tpu.dot_dimension_numbers<[1], [0], [0], [1], [0, 0, 1, 1], [], []>} : vector<14x7xf32>, vector<7x512xf32>, vector<14x512xf32> -> vector<14x512xf32>
    %cst_4 = arith.constant 1.600000e+01 : f32
    %4 = vector.broadcast %cst_4 : f32 to vector<14x512xf32>
    %5 = arith.subf %3, %4 : vector<14x512xf32>
    %cst_5 = arith.constant 0.000000e+00 : f32
    %6 = vector.broadcast %cst_5 : f32 to vector<14x512xf32>
    %7 = arith.maximumf %5, %6 : vector<14x512xf32>
    %c0_6 = arith.constant 0 : index
    %c0_7 = arith.constant 0 : index
    %c0_8 = arith.constant 0 : index
    %8 = vector.load %arg4[%c0_6, %c0_7, %c0_8] : memref<2x14x512xf32, #tpu.memory_space<vmem>>, vector<1x14x512xf32>
    %9 = vector.shape_cast %8 : vector<1x14x512xf32> to vector<14x512xf32>
    %10 = vector.shape_cast %7 : vector<14x512xf32> to vector<1x14x512xf32>
    tpu.vector_store %arg4[%c0_6, %c0_7, %c0_8], %10 {strides = array<i32>} : memref<2x14x512xf32, #tpu.memory_space<vmem>>, vector<1x14x512xf32>,
    %c1 = arith.constant 1 : index
    %c0_9 = arith.constant 0 : index
    %c0_10 = arith.constant 0 : index
    %11 = vector.load %arg2[%c1, %c0_9, %c0_10] : memref<2x9x512xf32, #tpu.memory_space<vmem>>, vector<1x7x512xf32>
    %12 = vector.shape_cast %11 : vector<1x7x512xf32> to vector<7x512xf32>
    %cst_11 = arith.constant dense<0.000000e+00> : vector<14x512xf32>
    %13 = tpu.matmul %0, %12, %cst_11 {dimension_numbers = #tpu.dot_dimension_numbers<[1], [0], [0], [1], [0, 0, 1, 1], [], []>} : vector<14x7xf32>, vector<7x512xf32>, vector<14x512xf32> -> vector<14x512xf32>
    %cst_12 = arith.constant 1.600000e+01 : f32
    %14 = vector.broadcast %cst_12 : f32 to vector<14x512xf32>
    %15 = arith.subf %13, %14 : vector<14x512xf32>
    %cst_13 = arith.constant 0.000000e+00 : f32
    %16 = vector.broadcast %cst_13 : f32 to vector<14x512xf32>
    %17 = arith.maximumf %15, %16 : vector<14x512xf32>
    %c1_14 = arith.constant 1 : index
    %c0_15 = arith.constant 0 : index
    %c0_16 = arith.constant 0 : index
    %18 = vector.load %arg4[%c1_14, %c0_15, %c0_16] : memref<2x14x512xf32, #tpu.memory_space<vmem>>, vector<1x14x512xf32>
    %19 = vector.shape_cast %18 : vector<1x14x512xf32> to vector<14x512xf32>
    %20 = vector.shape_cast %17 : vector<14x512xf32> to vector<1x14x512xf32>
    tpu.vector_store %arg4[%c1_14, %c0_15, %c0_16], %20 {strides = array<i32>} : memref<2x14x512xf32, #tpu.memory_space<vmem>>, vector<1x14x512xf32>,
    return
  }
  func.func @transform_0(%arg0: i32, %arg1: i32) -> (i32, i32, i32) {
    %c0_i32 = arith.constant 0 : i32
    %c0_i32_0 = arith.constant 0 : i32
    return %arg0, %c0_i32, %arg1 : i32, i32, i32
  }
  func.func @transform_1(%arg0: i32, %arg1: i32) -> (i32, i32) {
    %c0_i32 = arith.constant 0 : i32
    %c0_i32_0 = arith.constant 0 : i32
    %c0_i32_1 = arith.constant 0 : i32
    return %c0_i32, %c0_i32_0 : i32, i32
  }
  func.func @transform_2(%arg0: i32, %arg1: i32) -> (i32, i32, i32) {
    %c0_i32 = arith.constant 0 : i32
    %c0_i32_0 = arith.constant 0 : i32
    return %arg0, %c0_i32, %arg1 : i32, i32, i32
  }
}

</mosaic_0001>

<llo_original>
// kernel: tpu_custom_call.1
$region0: #{tpu_custom_call.1}
  #allocation0 [shape = 'u32[]', space=smem, size = 0x4, offset = 0x4, fixed_abs, tag = 'smem constant byte address 0x4 - core index']
  #allocation1 [shape = 'u32[144,128]{1,0:T(1,128)}', space=vmem, size = 0x12000, scoped, tag = 'internal scratch']
  %s0 = inlined_call_operand.vmem [shape: f32[2,9,1024], index: 0, kind: input, shape index: {}]
  %s1 = inlined_call_operand.vmem [shape: f32[14,7], index: 1, kind: input, shape index: {}]
  %s2 = inlined_call_operand.vmem [shape: f32[2,14,1024], index: 2, kind: output, shape index: {}]
  %s3 = sld [smem:[#allocation0]]
  $region83: #{tpu_custom_call.1} parent=0
    _
  %s5 = ssub.s32 1, %s3
  %s6 = scalar_select 0, %s5, %s3
  $region1: #{tpu_custom_call.1} parent=0
    #allocation2 [shape = 'u8[131072]{0}', space=vmem, size = 0x20000, scoped, tag = 'input window, operand 0']
    #allocation3 [shape = 'u8[131072]{0}', space=vmem, size = 0x20000, scoped, tag = 'output window, operand 0']
    loop: start=0, step=1, limit=4
    $region2: #{tpu_custom_call.1} parent=1 // loop_pre_header
      _
    $region3: #{tpu_custom_call.1} parent=1 // loop_header
      %s8 = sphi 0, %s12
      %p9 = scmp.ge.s32.totalorder %s8, 4
      %s15 = sphi 0, %s27
      %s16 = sphi 0, %s23
      %s17 = sphi 0, %s15
      %s18 = sphi 0, %s16
      %s19 = sphi 0, %s17
      %s20 = sphi 0, %s18
      %s32 = sphi 0, %s34
      %s35 = sphi 0, %s32
      %s36 = sphi 0, %s35
      %s52 = sphi 0, %s36
      %s56 = sphi 0, %s56
      %s58 = sphi 0, %s56
      %s59 = sphi 0, %s58
      %s73 = sphi 0, %s59
      %s81 = sphi 0, %s83
      %s84 = sphi 0, %s81
      %s85 = sphi 0, %s84
      %s101 = sphi 0, %s85
    $region4: #{tpu_custom_call.1} parent=1 // loop_header_branch
      %11 = sbr.rel (%p9) target = $region8
    $region5: #{tpu_custom_call.1} parent=1 // loop_body
      %s13 = ssub.s32 %s8, 1
      %s14 = ssub.s32 %s8, 2
      %s21 = sadd.s32 1, %s16
      %p22 = scmp.ge.s32.totalorder %s21, 2
      %s23 = scalar_select %p22, 0, %s21
      %s24 = sadd.s32 1, %s15
      %s25 = scalar_select %p22, %s24, %s15
      %p26 = scmp.ge.s32.totalorder %s25, 1
      %s27 = scalar_select %p26, 0, %s25
      %s28 = ssub.s32 %s15, %s27
      %s29 = ssub.s32 %s16, %s23
      %s30 = sor.u32 %s28, %s29
      %p31 = scmp.eq.s32.totalorder %s30, 0
      %s33 = sadd.s32 %s32, 1
      %s34 = scalar_select %p31, %s32, %s33
      %p37 = pneg %p31
      %p38 = scmp.eq.s32.totalorder %s8, 1
      %p39 = por %p37, %p38
      %p40 = scmp.ne.s32.totalorder %s32, %s35
      %p41 = scmp.eq.s32.totalorder %s8, 0
      %p42 = por %p40, %p41
      %p43 = scmp.ne.s32.totalorder %s32, %s35
      %p44 = scmp.eq.s32.totalorder %s13, 1
      %p45 = por %p43, %p44
      %p46 = scmp.ne.s32.totalorder %s35, %s36
      %p47 = scmp.eq.s32.totalorder %s13, 0
      %p48 = por %p46, %p47
      %p49 = scmp.ne.s32.totalorder %s35, %s36
      %p50 = scmp.eq.s32.totalorder %s14, 1
      %p51 = por %p49, %p50
      %p53 = scmp.ne.s32.totalorder %s36, %s52
      %p54 = scmp.eq.s32.totalorder %s14, 0
      %p55 = por %p53, %p54
      %s57 = sadd.s32 %s56, 1
      %p60 = scmp.eq.s32.totalorder %s8, 1
      %p61 = scmp.ne.s32.totalorder %s56, %s58
      %p62 = scmp.eq.s32.totalorder %s8, 0
      %p63 = por %p61, %p62
      %p64 = scmp.ne.s32.totalorder %s56, %s58
      %p65 = scmp.eq.s32.totalorder %s13, 1
      %p66 = por %p64, %p65
      %p67 = scmp.ne.s32.totalorder %s58, %s59
      %p68 = scmp.eq.s32.totalorder %s13, 0
      %p69 = por %p67, %p68
      %p70 = scmp.ne.s32.totalorder %s58, %s59
      %p71 = scmp.eq.s32.totalorder %s14, 1
      %p72 = por %p70, %p71
      %p74 = scmp.ne.s32.totalorder %s59, %s73
      %p75 = scmp.eq.s32.totalorder %s14, 0
      %p76 = por %p74, %p75
      %s77 = ssub.s32 %s15, %s27
      %s78 = ssub.s32 %s16, %s23
      %s79 = sor.u32 %s77, %s78
      %p80 = scmp.eq.s32.totalorder %s79, 0
      %s82 = sadd.s32 %s81, 1
      %s83 = scalar_select %p80, %s81, %s82
      %p86 = pneg %p80
      %p87 = scmp.eq.s32.totalorder %s8, 1
      %p88 = por %p86, %p87
      %p89 = scmp.ne.s32.totalorder %s81, %s84
      %p90 = scmp.eq.s32.totalorder %s8, 0
      %p91 = por %p89, %p90
      %p92 = scmp.ne.s32.totalorder %s81, %s84
      %p93 = scmp.eq.s32.totalorder %s13, 1
      %p94 = por %p92, %p93
      %p95 = scmp.ne.s32.totalorder %s84, %s85
      %p96 = scmp.eq.s32.totalorder %s13, 0
      %p97 = por %p95, %p96
      %p98 = scmp.ne.s32.totalorder %s84, %s85
      %p99 = scmp.eq.s32.totalorder %s14, 1
      %p100 = por %p98, %p99
      %p102 = scmp.ne.s32.totalorder %s85, %s101
      %p103 = scmp.eq.s32.totalorder %s14, 0
      %p104 = por %p102, %p103
      %p105 = scmp.le.s32.totalorder 1, %s8
      %p106 = scmp.lt.s32.totalorder %s8, 3
      %p107 = pnand %p105, %p106
      %p108 = pneg %p107
      // Predicated region
      $region9: #{tpu_custom_call.1} parent=5 // pred_check
        _
      $region10: #{tpu_custom_call.1} parent=5 // pred_check_branch
        %110 = sbr.rel (%p107) target = $region12
      $region11: #{tpu_custom_call.1} parent=5 // pred_region
        %s111 = ssub.s32 %s8, 1
        // Predicated region
        $region13: #{tpu_custom_call.1} parent=11 // pred_check
          %p112 = pneg %p69
        $region14: #{tpu_custom_call.1} parent=11 // pred_check_branch
          %114 = sbr.rel (%p112) target = $region16
        $region15: #{tpu_custom_call.1} parent=11 // pred_region
          _
        $region16: #{tpu_custom_call.1} parent=11 // pred_fallthru
          _
      $region12: #{tpu_custom_call.1} parent=5 // pred_fallthru
        _
      %p115 = scmp.lt.s32.totalorder %s8, 2
      // Predicated region
      $region17: #{tpu_custom_call.1} parent=5 // pred_check
        %p116 = pneg %p115
      $region18: #{tpu_custom_call.1} parent=5 // pred_check_branch
        %118 = sbr.rel (%p116) target = $region20
      $region19: #{tpu_custom_call.1} parent=5 // pred_region
        // Predicated region
        $region21: #{tpu_custom_call.1} parent=19 // pred_check
          %p119 = pneg %p42
        $region22: #{tpu_custom_call.1} parent=19 // pred_check_branch
          %121 = sbr.rel (%p119) target = $region24
        $region23: #{tpu_custom_call.1} parent=19 // pred_region
          %s122 = sand.u32 %s32, 1
          %s123 = sand.u32 %s32, 1
          %s124 = smul.addr %s123, 128
          %s125 = scalar_lea.vmem [#allocation2], %s124
          %s126 = smul.u32 2, %s15
          %s127 = smul.u32 4, %s16
          %s128 = smul.addr %s126, 16
          %s129 = sadd.s32 %s127, %s128
          %s130 = smul.addr %s129, 8
          %s131 = scalar_lea.vmem %s0, %s130
          // Predicated region
          $region25: #{tpu_custom_call.1} parent=23 // pred_check
            _
          $region26: #{tpu_custom_call.1} parent=23 // pred_check_branch
            %133 = sbr.rel (0) target = $region28
          $region27: #{tpu_custom_call.1} parent=23 // pred_region
            // Predicated region
            $region29: #{tpu_custom_call.1} parent=27 // pred_check
              _
            $region30: #{tpu_custom_call.1} parent=27 // pred_check_branch
              %135 = sbr.rel (0) target = $region32
            $region31: #{tpu_custom_call.1} parent=27 // pred_region
              loop: start=0, step=1, limit=1
              $region33: #{tpu_custom_call.1} parent=31 // loop_pre_header
                _
              $region34: #{tpu_custom_call.1} parent=31 // loop_header
                %s137 = sphi 0, %s141
                %p138 = scmp.ge.s32.totalorder %s137, 1
                %s142 = sphi %s131, %s131
                %s143 = sphi %s125, %s125
              $region35: #{tpu_custom_call.1} parent=31 // loop_header_branch
                %140 = sbr.rel (%p138) target = $region39
              $region36: #{tpu_custom_call.1} parent=31 // loop_body
                %v144 = vld [vmem:[%s142] sm:$0xff]
                %145 = vst [vmem:[%s143] sm:$0xff] %v144
                %v146 = vld [vmem:[%s142 + $0x8] sm:$0xff]
                %147 = vst [vmem:[%s143 + $0x8] sm:$0xff] %v146
                %v148 = vld [vmem:[%s142 + $0x10] sm:$0xff]
                %149 = vst [vmem:[%s143 + $0x10] sm:$0xff] %v148
                %v150 = vld [vmem:[%s142 + $0x18] sm:$0xff]
                %151 = vst [vmem:[%s143 + $0x18] sm:$0xff] %v150
                %v152 = vld [vmem:[%s142 + $0x40] sm:$0xff]
                %153 = vst [vmem:[%s143 + $0x20] sm:$0xff] %v152
                %v154 = vld [vmem:[%s142 + $0x48] sm:$0xff]
                %155 = vst [vmem:[%s143 + $0x28] sm:$0xff] %v154
                %v156 = vld [vmem:[%s142 + $0x50] sm:$0xff]
                %157 = vst [vmem:[%s143 + $0x30] sm:$0xff] %v156
                %v158 = vld [vmem:[%s142 + $0x58] sm:$0xff]
                %159 = vst [vmem:[%s143 + $0x38] sm:$0xff] %v158
                %v160 = vld [vmem:[%s142 + $0x80] sm:$0xff]
                %161 = vst [vmem:[%s143 + $0x40] sm:$0xff] %v160
                %v162 = vld [vmem:[%s142 + $0x88] sm:$0xff]
                %163 = vst [vmem:[%s143 + $0x48] sm:$0xff] %v162
                %v164 = vld [vmem:[%s142 + $0x90] sm:$0xff]
                %165 = vst [vmem:[%s143 + $0x50] sm:$0xff] %v164
                %v166 = vld [vmem:[%s142 + $0x98] sm:$0xff]
                %167 = vst [vmem:[%s143 + $0x58] sm:$0xff] %v166
                %v168 = vld [vmem:[%s142 + $0xc0] sm:$0xff]
                %169 = vst [vmem:[%s143 + $0x60] sm:$0xff] %v168
                %v170 = vld [vmem:[%s142 + $0xc8] sm:$0xff]
                %171 = vst [vmem:[%s143 + $0x68] sm:$0xff] %v170
                %v172 = vld [vmem:[%s142 + $0xd0] sm:$0xff]
                %173 = vst [vmem:[%s143 + $0x70] sm:$0xff] %v172
                %v174 = vld [vmem:[%s142 + $0xd8] sm:$0xff]
                %175 = vst [vmem:[%s143 + $0x78] sm:$0xff] %v174
              $region37: #{tpu_custom_call.1} parent=31 // loop_footer
                %s141 = sadd.s32 1, %s137
              $region38: #{tpu_custom_call.1} parent=31 // loop_footer_branch
                %136 = sbr.rel target = $region34
              $region39: #{tpu_custom_call.1} parent=31 // loop_exit
                _
            $region32: #{tpu_custom_call.1} parent=27 // pred_fallthru
              _
            // Predicated region
            $region40: #{tpu_custom_call.1} parent=27 // pred_check
              _
            $region41: #{tpu_custom_call.1} parent=27 // pred_check_branch
              %177 = sbr.rel target = $region43
            $region42: #{tpu_custom_call.1} parent=27 // pred_region
              _
            $region43: #{tpu_custom_call.1} parent=27 // pred_fallthru
              _
          $region28: #{tpu_custom_call.1} parent=23 // pred_fallthru
            _
          %178 = vnop
        $region24: #{tpu_custom_call.1} parent=19 // pred_fallthru
          _
      $region20: #{tpu_custom_call.1} parent=5 // pred_fallthru
        _
      %p179 = scmp.le.s32.totalorder 1, %s8
      %p180 = scmp.lt.s32.totalorder %s8, 3
      %p181 = pnand %p179, %p180
      %p182 = pneg %p181
      // Predicated region
      $region44: #{tpu_custom_call.1} parent=5 // pred_check
        _
      $region45: #{tpu_custom_call.1} parent=5 // pred_check_branch
        %184 = sbr.rel (%p181) target = $region47
      $region46: #{tpu_custom_call.1} parent=5 // pred_region
        %s185 = ssub.s32 %s8, 1
        %s186 = sand.u32 %s35, 1
        %s187 = sand.u32 %s35, 1
        %s188 = smul.addr %s187, 128
        %s189 = scalar_lea.vmem [#allocation2], %s188
        // Predicated region
        $region48: #{tpu_custom_call.1} parent=46 // pred_check
          %p190 = pneg %p48
        $region49: #{tpu_custom_call.1} parent=46 // pred_check_branch
          %192 = sbr.rel (%p190) target = $region51
        $region50: #{tpu_custom_call.1} parent=46 // pred_region
          _
        $region51: #{tpu_custom_call.1} parent=46 // pred_fallthru
          _
        %s193 = sand.u32 %s35, 1
        %s194 = sand.u32 %s35, 1
        %s195 = smul.addr %s194, 128
        %s196 = scalar_lea.vmem [#allocation2], %s195
        %p197 = pneg %p48
        %p198 = pneg %p45
        %p199 = pneg %p69
        %p200 = pneg %p66
        %p201 = pneg %p97
        %p202 = pneg %p94
        %s203 = sand.u32 %s84, 1
        %s204 = sand.u32 %s84, 1
        %s205 = smul.addr %s204, 128
        %s206 = scalar_lea.vmem [#allocation3], %s205
        %s207 = smul.u32 2, %s17
        %s208 = smul.u32 4, %s18
        %s209 = smul.u32 2, %s17
        %s210 = smul.u32 4, %s18
        %v211 = vld [vmem:[%s1] sm:$0xff]
        %v212 = vld [vmem:[%s1 + $0x8] sm:$0x3f]
        %v213 = vld [vmem:[%s189] sm:$0x7f]
        %v214 = vld [vmem:[%s189 + $0x8] sm:$0x7f]
        %v215 = vld [vmem:[%s189 + $0x10] sm:$0x7f]
        %v216 = vld [vmem:[%s189 + $0x18] sm:$0x7f]
        %vm217 = vcmask 56320
        %v219 = vsel %vm217, %v211, 0
        %v222 = vsel %vm217, %v212, 0
        %vm224 = vcmask 1046528
        %v226 = vsel %vm224, %v213, 0
        %v229 = vsel %vm224, %v214, 0
        %v232 = vsel %vm224, %v215, 0
        %v235 = vsel %vm224, %v216, 0
        %237 = vmatprep.subr.mxu0 %v229
        %238 = vmatpush1.msra.mxu0 %v226
        %239 = vmatprep.subr.mxu0 0.0
        %240 = vmatpush1.msra.mxu0 0.0
        %241 = vmatprep.subr.mxu0 0.0
        %242 = vmatpush1.msra.mxu0 0.0
        %243 = vmatprep.subr.mxu0 0.0
        %244 = vmatpush1.msra.mxu0 0.0
        %245 = vmatprep.subr.mxu0 0.0
        %246 = vmatpush1.msra.mxu0 0.0
        %247 = vmatprep.subr.mxu0 0.0
        %248 = vmatpush1.msra.mxu0 0.0
        %249 = vmatprep.subr.mxu0 0.0
        %250 = vmatpush1.msra.mxu0 0.0
        %251 = vmatprep.subr.mxu0 0.0
        %252 = vmatpush1.msra.mxu0 0.0
        %253 = vmatprep.subr.mxu0 0.0
        %254 = vmatpush1.msra.mxu0 0.0
        %255 = vmatprep.subr.mxu0 0.0
        %256 = vmatpush1.msra.mxu0 0.0
        %257 = vmatprep.subr.mxu0 0.0
        %258 = vmatpush1.msra.mxu0 0.0
        %259 = vmatprep.subr.mxu0 0.0
        %260 = vmatpush1.msra.mxu0 0.0
        %261 = vmatprep.subr.mxu0 0.0
        %262 = vmatpush1.msra.mxu0 0.0
        %263 = vmatprep.subr.mxu0 0.0
        %264 = vmatpush1.msra.mxu0 0.0
        %265 = vmatprep.subr.mxu0 0.0
        %266 = vmatpush1.msra.mxu0 0.0
        %267 = vmatprep.subr.mxu0 0.0
        %268 = vmatpush1.msra.mxu0 0.0
        %269 = vmatprep.subr.mxu0 0.0
        %270 = vmatpush1.msra.mxu0 0.0
        %271 = vmatprep.subr.mxu0 0.0
        %272 = vmatpush1.msra.mxu0 0.0
        %273 = vmatprep.subr.mxu0 0.0
        %274 = vmatpush1.msra.mxu0 0.0
        %275 = vmatprep.subr.mxu0 0.0
        %276 = vmatpush1.msra.mxu0 0.0
        %277 = vmatprep.subr.mxu0 0.0
        %278 = vmatpush1.msra.mxu0 0.0
        %279 = vmatprep.subr.mxu0 0.0
        %280 = vmatpush1.msra.mxu0 0.0
        %281 = vmatprep.subr.mxu0 0.0
        %282 = vmatpush1.msra.mxu0 0.0
        %283 = vmatprep.subr.mxu0 0.0
        %284 = vmatpush1.msra.mxu0 0.0
        %285 = vmatprep.subr.mxu0 0.0
        %286 = vmatpush1.msra.mxu0 0.0
        %287 = vmatprep.subr.mxu0 0.0
        %288 = vmatpush1.msra.mxu0 0.0
        %289 = vmatprep.subr.mxu0 0.0
        %290 = vmatpush1.msra.mxu0 0.0
        %291 = vmatprep.subr.mxu0 0.0
        %292 = vmatpush1.msra.mxu0 0.0
        %293 = vmatprep.subr.mxu0 0.0
        %294 = vmatpush1.msra.mxu0 0.0
        %295 = vmatprep.subr.mxu0 0.0
        %296 = vmatpush1.msra.mxu0 0.0
        %297 = vmatprep.subr.mxu0 0.0
        %298 = vmatpush1.msra.mxu0 0.0
        %299 = vmatprep.subr.mxu0 0.0
        %300 = vmatpush1.msra.mxu0 0.0
        %301 = vmatprep.mubr.f32.mxu0 0.0
        %302 = vmatmul.mubr.f32.gmra.mrb[0].mxu0 %v219
        %v303 = vpop.f32.mrb[0].mxu0
        %v304 = vadd.f32 0.0, %v303
        %v305 = vpop.f32.mrb[0].mxu0
        %v306 = vadd.f32 0.0, %v305
        %307 = vmatprep.mubr.f32.mxu0 0.0
        %308 = vmatmul.mubr.f32.gmra.mrb[0].mxu0 %v222
        %v309 = vpop.f32.mrb[0].mxu0
        %v310 = vadd.f32 0.0, %v309
        %v311 = vpop.f32.mrb[0].mxu0
        %v312 = vadd.f32 0.0, %v311
        %313 = vdwg.mxu0
        %314 = vmatprep.subr.mxu0 %v235
        %315 = vmatpush1.msra.mxu0 %v232
        %316 = vmatprep.subr.mxu0 0.0
        %317 = vmatpush1.msra.mxu0 0.0
        %318 = vmatprep.subr.mxu0 0.0
        %319 = vmatpush1.msra.mxu0 0.0
        %320 = vmatprep.subr.mxu0 0.0
        %321 = vmatpush1.msra.mxu0 0.0
        %322 = vmatprep.subr.mxu0 0.0
        %323 = vmatpush1.msra.mxu0 0.0
        %324 = vmatprep.subr.mxu0 0.0
        %325 = vmatpush1.msra.mxu0 0.0
        %326 = vmatprep.subr.mxu0 0.0
        %327 = vmatpush1.msra.mxu0 0.0
        %328 = vmatprep.subr.mxu0 0.0
        %329 = vmatpush1.msra.mxu0 0.0
        %330 = vmatprep.subr.mxu0 0.0
        %331 = vmatpush1.msra.mxu0 0.0
        %332 = vmatprep.subr.mxu0 0.0
        %333 = vmatpush1.msra.mxu0 0.0
        %334 = vmatprep.subr.mxu0 0.0
        %335 = vmatpush1.msra.mxu0 0.0
        %336 = vmatprep.subr.mxu0 0.0
        %337 = vmatpush1.msra.mxu0 0.0
        %338 = vmatprep.subr.mxu0 0.0
        %339 = vmatpush1.msra.mxu0 0.0
        %340 = vmatprep.subr.mxu0 0.0
        %341 = vmatpush1.msra.mxu0 0.0
        %342 = vmatprep.subr.mxu0 0.0
        %343 = vmatpush1.msra.mxu0 0.0
        %344 = vmatprep.subr.mxu0 0.0
        %345 = vmatpush1.msra.mxu0 0.0
        %346 = vmatprep.subr.mxu0 0.0
        %347 = vmatpush1.msra.mxu0 0.0
        %348 = vmatprep.subr.mxu0 0.0
        %349 = vmatpush1.msra.mxu0 0.0
        %350 = vmatprep.subr.mxu0 0.0
        %351 = vmatpush1.msra.mxu0 0.0
        %352 = vmatprep.subr.mxu0 0.0
        %353 = vmatpush1.msra.mxu0 0.0
        %354 = vmatprep.subr.mxu0 0.0
        %355 = vmatpush1.msra.mxu0 0.0
        %356 = vmatprep.subr.mxu0 0.0
        %357 = vmatpush1.msra.mxu0 0.0
        %358 = vmatprep.subr.mxu0 0.0
        %359 = vmatpush1.msra.mxu0 0.0
        %360 = vmatprep.subr.mxu0 0.0
        %361 = vmatpush1.msra.mxu0 0.0
        %362 = vmatprep.subr.mxu0 0.0
        %363 = vmatpush1.msra.mxu0 0.0
        %364 = vmatprep.subr.mxu0 0.0
        %365 = vmatpush1.msra.mxu0 0.0
        %366 = vmatprep.subr.mxu0 0.0
        %367 = vmatpush1.msra.mxu0 0.0
        %368 = vmatprep.subr.mxu0 0.0
        %369 = vmatpush1.msra.mxu0 0.0
        %370 = vmatprep.subr.mxu0 0.0
        %371 = vmatpush1.msra.mxu0 0.0
        %372 = vmatprep.subr.mxu0 0.0
        %373 = vmatpush1.msra.mxu0 0.0
        %374 = vmatprep.subr.mxu0 0.0
        %375 = vmatpush1.msra.mxu0 0.0
        %376 = vmatprep.subr.mxu0 0.0
        %377 = vmatpush1.msra.mxu0 0.0
        %378 = vmatprep.mubr.f32.mxu0 0.0
        %379 = vmatmul.mubr.f32.gmra.mrb[0].mxu0 %v219
        %v380 = vpop.f32.mrb[0].mxu0
        %v381 = vadd.f32 0.0, %v380
        %v382 = vpop.f32.mrb[0].mxu0
        %v383 = vadd.f32 0.0, %v382
        %384 = vmatprep.mubr.f32.mxu0 0.0
        %385 = vmatmul.mubr.f32.gmra.mrb[0].mxu0 %v222
        %v386 = vpop.f32.mrb[0].mxu0
        %v387 = vadd.f32 0.0, %v386
        %v388 = vpop.f32.mrb[0].mxu0
        %v389 = vadd.f32 0.0, %v388
        %390 = vdwg.mxu0
        %v391 = vsub.f32 %v304, 16.0
        %v392 = vsub.f32 %v306, 16.0
        %v393 = vsub.f32 %v381, 16.0
        %v394 = vsub.f32 %v383, 16.0
        %v395 = vsub.f32 %v310, 16.0
        %v396 = vsub.f32 %v312, 16.0
        %v397 = vsub.f32 %v387, 16.0
        %v398 = vsub.f32 %v389, 16.0
        %v399 = vmax.f32 %v391, 0.0
        %v400 = vmax.f32 %v392, 0.0
        %v401 = vmax.f32 %v393, 0.0
        %v402 = vmax.f32 %v394, 0.0
        %v403 = vmax.f32 %v395, 0.0
        %v404 = vmax.f32 %v396, 0.0
        %v405 = vmax.f32 %v397, 0.0
        %v406 = vmax.f32 %v398, 0.0
        %407 = vst [vmem:[%s206] sm:$0xff] %v399
        %408 = vst [vmem:[%s206 + $0x8] sm:$0xff] %v400
        %409 = vst [vmem:[%s206 + $0x10] sm:$0xff] %v401
        %410 = vst [vmem:[%s206 + $0x18] sm:$0xff] %v402
        %411 = vst [vmem:[%s206 + $0x20] sm:$0x3f] %v403
        %412 = vst [vmem:[%s206 + $0x28] sm:$0x3f] %v404
        %413 = vst [vmem:[%s206 + $0x30] sm:$0x3f] %v405
        %414 = vst [vmem:[%s206 + $0x38] sm:$0x3f] %v406
        %s415 = scalar_lea.vmem %s189, 64 [#allocation2]
        %v416 = vld [vmem:[%s415] sm:$0x7f]
        %v417 = vld [vmem:[%s415 + $0x8] sm:$0x7f]
        %v418 = vld [vmem:[%s415 + $0x10] sm:$0x7f]
        %v419 = vld [vmem:[%s415 + $0x18] sm:$0x7f]
        %v421 = vsel %vm224, %v416, 0
        %v424 = vsel %vm224, %v417, 0
        %v427 = vsel %vm224, %v418, 0
        %v430 = vsel %vm224, %v419, 0
        %432 = vmatprep.subr.mxu0 %v424
        %433 = vmatpush1.msra.mxu0 %v421
        %434 = vmatprep.subr.mxu0 0.0
        %435 = vmatpush1.msra.mxu0 0.0
        %436 = vmatprep.subr.mxu0 0.0
        %437 = vmatpush1.msra.mxu0 0.0
        %438 = vmatprep.subr.mxu0 0.0
        %439 = vmatpush1.msra.mxu0 0.0
        %440 = vmatprep.subr.mxu0 0.0
        %441 = vmatpush1.msra.mxu0 0.0
        %442 = vmatprep.subr.mxu0 0.0
        %443 = vmatpush1.msra.mxu0 0.0
        %444 = vmatprep.subr.mxu0 0.0
        %445 = vmatpush1.msra.mxu0 0.0
        %446 = vmatprep.subr.mxu0 0.0
        %447 = vmatpush1.msra.mxu0 0.0
        %448 = vmatprep.subr.mxu0 0.0
        %449 = vmatpush1.msra.mxu0 0.0
        %450 = vmatprep.subr.mxu0 0.0
        %451 = vmatpush1.msra.mxu0 0.0
        %452 = vmatprep.subr.mxu0 0.0
        %453 = vmatpush1.msra.mxu0 0.0
        %454 = vmatprep.subr.mxu0 0.0
        %455 = vmatpush1.msra.mxu0 0.0
        %456 = vmatprep.subr.mxu0 0.0
        %457 = vmatpush1.msra.mxu0 0.0
        %458 = vmatprep.subr.mxu0 0.0
        %459 = vmatpush1.msra.mxu0 0.0
        %460 = vmatprep.subr.mxu0 0.0
        %461 = vmatpush1.msra.mxu0 0.0
        %462 = vmatprep.subr.mxu0 0.0
        %463 = vmatpush1.msra.mxu0 0.0
        %464 = vmatprep.subr.mxu0 0.0
        %465 = vmatpush1.msra.mxu0 0.0
        %466 = vmatprep.subr.mxu0 0.0
        %467 = vmatpush1.msra.mxu0 0.0
        %468 = vmatprep.subr.mxu0 0.0
        %469 = vmatpush1.msra.mxu0 0.0
        %470 = vmatprep.subr.mxu0 0.0
        %471 = vmatpush1.msra.mxu0 0.0
        %472 = vmatprep.subr.mxu0 0.0
        %473 = vmatpush1.msra.mxu0 0.0
        %474 = vmatprep.subr.mxu0 0.0
        %475 = vmatpush1.msra.mxu0 0.0
        %476 = vmatprep.subr.mxu0 0.0
        %477 = vmatpush1.msra.mxu0 0.0
        %478 = vmatprep.subr.mxu0 0.0
        %479 = vmatpush1.msra.mxu0 0.0
        %480 = vmatprep.subr.mxu0 0.0
        %481 = vmatpush1.msra.mxu0 0.0
        %482 = vmatprep.subr.mxu0 0.0
        %483 = vmatpush1.msra.mxu0 0.0
        %484 = vmatprep.subr.mxu0 0.0
        %485 = vmatpush1.msra.mxu0 0.0
        %486 = vmatprep.subr.mxu0 0.0
        %487 = vmatpush1.msra.mxu0 0.0
        %488 = vmatprep.subr.mxu0 0.0
        %489 = vmatpush1.msra.mxu0 0.0
        %490 = vmatprep.subr.mxu0 0.0
        %491 = vmatpush1.msra.mxu0 0.0
        %492 = vmatprep.subr.mxu0 0.0
        %493 = vmatpush1.msra.mxu0 0.0
        %494 = vmatprep.subr.mxu0 0.0
        %495 = vmatpush1.msra.mxu0 0.0
        %496 = vmatprep.mubr.f32.mxu0 0.0
        %497 = vmatmul.mubr.f32.gmra.mrb[0].mxu0 %v219
        %v498 = vpop.f32.mrb[0].mxu0
        %v499 = vadd.f32 0.0, %v498
        %v500 = vpop.f32.mrb[0].mxu0
        %v501 = vadd.f32 0.0, %v500
        %502 = vmatprep.mubr.f32.mxu0 0.0
        %503 = vmatmul.mubr.f32.gmra.mrb[0].mxu0 %v222
        %v504 = vpop.f32.mrb[0].mxu0
        %v505 = vadd.f32 0.0, %v504
        %v506 = vpop.f32.mrb[0].mxu0
        %v507 = vadd.f32 0.0, %v506
        %508 = vdwg.mxu0
        %509 = vmatprep.subr.mxu0 %v430
        %510 = vmatpush1.msra.mxu0 %v427
        %511 = vmatprep.subr.mxu0 0.0
        %512 = vmatpush1.msra.mxu0 0.0
        %513 = vmatprep.subr.mxu0 0.0
        %514 = vmatpush1.msra.mxu0 0.0
        %515 = vmatprep.subr.mxu0 0.0
        %516 = vmatpush1.msra.mxu0 0.0
        %517 = vmatprep.subr.mxu0 0.0
        %518 = vmatpush1.msra.mxu0 0.0
        %519 = vmatprep.subr.mxu0 0.0
        %520 = vmatpush1.msra.mxu0 0.0
        %521 = vmatprep.subr.mxu0 0.0
        %522 = vmatpush1.msra.mxu0 0.0
        %523 = vmatprep.subr.mxu0 0.0
        %524 = vmatpush1.msra.mxu0 0.0
        %525 = vmatprep.subr.mxu0 0.0
        %526 = vmatpush1.msra.mxu0 0.0
        %527 = vmatprep.subr.mxu0 0.0
        %528 = vmatpush1.msra.mxu0 0.0
        %529 = vmatprep.subr.mxu0 0.0
        %530 = vmatpush1.msra.mxu0 0.0
        %531 = vmatprep.subr.mxu0 0.0
        %532 = vmatpush1.msra.mxu0 0.0
        %533 = vmatprep.subr.mxu0 0.0
        %534 = vmatpush1.msra.mxu0 0.0
        %535 = vmatprep.subr.mxu0 0.0
        %536 = vmatpush1.msra.mxu0 0.0
        %537 = vmatprep.subr.mxu0 0.0
        %538 = vmatpush1.msra.mxu0 0.0
        %539 = vmatprep.subr.mxu0 0.0
        %540 = vmatpush1.msra.mxu0 0.0
        %541 = vmatprep.subr.mxu0 0.0
        %542 = vmatpush1.msra.mxu0 0.0
        %543 = vmatprep.subr.mxu0 0.0
        %544 = vmatpush1.msra.mxu0 0.0
        %545 = vmatprep.subr.mxu0 0.0
        %546 = vmatpush1.msra.mxu0 0.0
        %547 = vmatprep.subr.mxu0 0.0
        %548 = vmatpush1.msra.mxu0 0.0
        %549 = vmatprep.subr.mxu0 0.0
        %550 = vmatpush1.msra.mxu0 0.0
        %551 = vmatprep.subr.mxu0 0.0
        %552 = vmatpush1.msra.mxu0 0.0
        %553 = vmatprep.subr.mxu0 0.0
        %554 = vmatpush1.msra.mxu0 0.0
        %555 = vmatprep.subr.mxu0 0.0
        %556 = vmatpush1.msra.mxu0 0.0
        %557 = vmatprep.subr.mxu0 0.0
        %558 = vmatpush1.msra.mxu0 0.0
        %559 = vmatprep.subr.mxu0 0.0
        %560 = vmatpush1.msra.mxu0 0.0
        %561 = vmatprep.subr.mxu0 0.0
        %562 = vmatpush1.msra.mxu0 0.0
        %563 = vmatprep.subr.mxu0 0.0
        %564 = vmatpush1.msra.mxu0 0.0
        %565 = vmatprep.subr.mxu0 0.0
        %566 = vmatpush1.msra.mxu0 0.0
        %567 = vmatprep.subr.mxu0 0.0
        %568 = vmatpush1.msra.mxu0 0.0
        %569 = vmatprep.subr.mxu0 0.0
        %570 = vmatpush1.msra.mxu0 0.0
        %571 = vmatprep.subr.mxu0 0.0
        %572 = vmatpush1.msra.mxu0 0.0
        %573 = vmatprep.mubr.f32.mxu0 0.0
        %574 = vmatmul.mubr.f32.gmra.mrb[0].mxu0 %v219
        %v575 = vpop.f32.mrb[0].mxu0
        %v576 = vadd.f32 0.0, %v575
        %v577 = vpop.f32.mrb[0].mxu0
        %v578 = vadd.f32 0.0, %v577
        %579 = vmatprep.mubr.f32.mxu0 0.0
        %580 = vmatmul.mubr.f32.gmra.mrb[0].mxu0 %v222
        %v581 = vpop.f32.mrb[0].mxu0
        %v582 = vadd.f32 0.0, %v581
        %v583 = vpop.f32.mrb[0].mxu0
        %v584 = vadd.f32 0.0, %v583
        %585 = vdwg.mxu0
        %v586 = vsub.f32 %v499, 16.0
        %v587 = vsub.f32 %v501, 16.0
        %v588 = vsub.f32 %v576, 16.0
        %v589 = vsub.f32 %v578, 16.0
        %v590 = vsub.f32 %v505, 16.0
        %v591 = vsub.f32 %v507, 16.0
        %v592 = vsub.f32 %v582, 16.0
        %v593 = vsub.f32 %v584, 16.0
        %v594 = vmax.f32 %v586, 0.0
        %v595 = vmax.f32 %v587, 0.0
        %v596 = vmax.f32 %v588, 0.0
        %v597 = vmax.f32 %v589, 0.0
        %v598 = vmax.f32 %v590, 0.0
        %v599 = vmax.f32 %v591, 0.0
        %v600 = vmax.f32 %v592, 0.0
        %v601 = vmax.f32 %v593, 0.0
        %s602 = scalar_lea.vmem %s206, 64 [#allocation3]
        %603 = vst [vmem:[%s602] sm:$0xff] %v594
        %604 = vst [vmem:[%s602 + $0x8] sm:$0xff] %v595
        %605 = vst [vmem:[%s602 + $0x10] sm:$0xff] %v596
        %606 = vst [vmem:[%s602 + $0x18] sm:$0xff] %v597
        %607 = vst [vmem:[%s602 + $0x20] sm:$0x3f] %v598
        %608 = vst [vmem:[%s602 + $0x28] sm:$0x3f] %v599
        %609 = vst [vmem:[%s602 + $0x30] sm:$0x3f] %v600
        %610 = vst [vmem:[%s602 + $0x38] sm:$0x3f] %v601
        %s611 = sand.u32 %s84, 1
        %s612 = sand.u32 %s84, 1
        %s613 = smul.addr %s612, 128
        %s614 = scalar_lea.vmem [#allocation3], %s613
        // Predicated region
        $region52: #{tpu_custom_call.1} parent=46 // pred_check
          %p615 = pneg %p94
        $region53: #{tpu_custom_call.1} parent=46 // pred_check_branch
          %617 = sbr.rel (%p615) target = $region55
        $region54: #{tpu_custom_call.1} parent=46 // pred_region
          %s618 = smul.u32 2, %s17
          %s619 = smul.u32 4, %s18
          %s620 = smul.addr %s618, 16
          %s621 = sadd.s32 %s619, %s620
          %s622 = smul.addr %s621, 8
          %s623 = scalar_lea.vmem %s2, %s622
          // Predicated region
          $region56: #{tpu_custom_call.1} parent=54 // pred_check
            _
          $region57: #{tpu_custom_call.1} parent=54 // pred_check_branch
            %625 = sbr.rel (0) target = $region59
          $region58: #{tpu_custom_call.1} parent=54 // pred_region
            // Predicated region
            $region60: #{tpu_custom_call.1} parent=58 // pred_check
              _
            $region61: #{tpu_custom_call.1} parent=58 // pred_check_branch
              %627 = sbr.rel (0) target = $region63
            $region62: #{tpu_custom_call.1} parent=58 // pred_region
              loop: start=0, step=1, limit=1
              $region64: #{tpu_custom_call.1} parent=62 // loop_pre_header
                _
              $region65: #{tpu_custom_call.1} parent=62 // loop_header
                %s629 = sphi 0, %s633
                %p630 = scmp.ge.s32.totalorder %s629, 1
                %s634 = sphi %s614, %s614
                %s635 = sphi %s623, %s623
              $region66: #{tpu_custom_call.1} parent=62 // loop_header_branch
                %632 = sbr.rel (%p630) target = $region70
              $region67: #{tpu_custom_call.1} parent=62 // loop_body
                %v636 = vld [vmem:[%s634] sm:$0xff]
                %637 = vst [vmem:[%s635] sm:$0xff] %v636
                %v638 = vld [vmem:[%s634 + $0x8] sm:$0xff]
                %639 = vst [vmem:[%s635 + $0x8] sm:$0xff] %v638
                %v640 = vld [vmem:[%s634 + $0x10] sm:$0xff]
                %641 = vst [vmem:[%s635 + $0x10] sm:$0xff] %v640
                %v642 = vld [vmem:[%s634 + $0x18] sm:$0xff]
                %643 = vst [vmem:[%s635 + $0x18] sm:$0xff] %v642
                %v644 = vld [vmem:[%s634 + $0x20] sm:$0xff]
                %645 = vst [vmem:[%s635 + $0x40] sm:$0xff] %v644
                %v646 = vld [vmem:[%s634 + $0x28] sm:$0xff]
                %647 = vst [vmem:[%s635 + $0x48] sm:$0xff] %v646
                %v648 = vld [vmem:[%s634 + $0x30] sm:$0xff]
                %649 = vst [vmem:[%s635 + $0x50] sm:$0xff] %v648
                %v650 = vld [vmem:[%s634 + $0x38] sm:$0xff]
                %651 = vst [vmem:[%s635 + $0x58] sm:$0xff] %v650
                %v652 = vld [vmem:[%s634 + $0x40] sm:$0xff]
                %653 = vst [vmem:[%s635 + $0x80] sm:$0xff] %v652
                %v654 = vld [vmem:[%s634 + $0x48] sm:$0xff]
                %655 = vst [vmem:[%s635 + $0x88] sm:$0xff] %v654
                %v656 = vld [vmem:[%s634 + $0x50] sm:$0xff]
                %657 = vst [vmem:[%s635 + $0x90] sm:$0xff] %v656
                %v658 = vld [vmem:[%s634 + $0x58] sm:$0xff]
                %659 = vst [vmem:[%s635 + $0x98] sm:$0xff] %v658
                %v660 = vld [vmem:[%s634 + $0x60] sm:$0xff]
                %661 = vst [vmem:[%s635 + $0xc0] sm:$0xff] %v660
                %v662 = vld [vmem:[%s634 + $0x68] sm:$0xff]
                %663 = vst [vmem:[%s635 + $0xc8] sm:$0xff] %v662
                %v664 = vld [vmem:[%s634 + $0x70] sm:$0xff]
                %665 = vst [vmem:[%s635 + $0xd0] sm:$0xff] %v664
                %v666 = vld [vmem:[%s634 + $0x78] sm:$0xff]
                %667 = vst [vmem:[%s635 + $0xd8] sm:$0xff] %v666
              $region68: #{tpu_custom_call.1} parent=62 // loop_footer
                %s633 = sadd.s32 1, %s629
              $region69: #{tpu_custom_call.1} parent=62 // loop_footer_branch
                %628 = sbr.rel target = $region65
              $region70: #{tpu_custom_call.1} parent=62 // loop_exit
                _
            $region63: #{tpu_custom_call.1} parent=58 // pred_fallthru
              _
            // Predicated region
            $region71: #{tpu_custom_call.1} parent=58 // pred_check
              _
            $region72: #{tpu_custom_call.1} parent=58 // pred_check_branch
              %669 = sbr.rel target = $region74
            $region73: #{tpu_custom_call.1} parent=58 // pred_region
              _
            $region74: #{tpu_custom_call.1} parent=58 // pred_fallthru
              _
          $region59: #{tpu_custom_call.1} parent=54 // pred_fallthru
            _
          %670 = vnop
        $region55: #{tpu_custom_call.1} parent=46 // pred_fallthru
          _
      $region47: #{tpu_custom_call.1} parent=5 // pred_fallthru
        _
      %p671 = scmp.le.s32.totalorder 2, %s8
      // Predicated region
      $region75: #{tpu_custom_call.1} parent=5 // pred_check
        %p672 = pneg %p671
      $region76: #{tpu_custom_call.1} parent=5 // pred_check_branch
        %674 = sbr.rel (%p672) target = $region78
      $region77: #{tpu_custom_call.1} parent=5 // pred_region
        %s675 = ssub.s32 %s8, 2
        // Predicated region
        $region79: #{tpu_custom_call.1} parent=77 // pred_check
          %p676 = pneg %p100
        $region80: #{tpu_custom_call.1} parent=77 // pred_check_branch
          %678 = sbr.rel (%p676) target = $region82
        $region81: #{tpu_custom_call.1} parent=77 // pred_region
          %s679 = sand.u32 %s85, 1
          %s680 = sand.u32 %s85, 1
          %s681 = smul.addr %s680, 128
          %s682 = scalar_lea.vmem [#allocation3], %s681
        $region82: #{tpu_custom_call.1} parent=77 // pred_fallthru
          _
      $region78: #{tpu_custom_call.1} parent=5 // pred_fallthru
        _
    $region6: #{tpu_custom_call.1} parent=1 // loop_footer
      %s12 = sadd.s32 1, %s8
    $region7: #{tpu_custom_call.1} parent=1 // loop_footer_branch
      %7 = sbr.rel target = $region3
    $region8: #{tpu_custom_call.1} parent=1 // loop_exit
      _

</llo_original>
